<compile_context>
chip_gen: v5e
topology: v5e:2x2
jax: 0.10.0
libtpu: 0.0.40
codegen_flags: <defaults>
</compile_context>

<pallas_src>
import functools

import numpy as np
import jax
import jax.numpy as jnp
from jax.experimental import pallas as pl
from jax.experimental.pallas import tpu as pltpu


_LANE = 128
_MAX_TILE_ROWS = 1024  # 512-1024 row tiles already reach ~85% of HBM roofline.


def _round_up(x: int, mult: int) -> int:
    return ((x + mult - 1) // mult) * mult


def _device_kind() -> str:
    try:
        return jax.devices()[0].device_kind.lower()
    except Exception:  # pragma: no cover - defensive
        return ""


def _vmem_budget_bytes(kind: str) -> int:
    """Per-generation VMEM budget under the default scoped limits."""
    if "v6" in kind:
        return 26 * 1024 * 1024   # 32 MiB scoped default (128 MiB physical)
    if "v7" in kind:
        return 22 * 1024 * 1024   # 32 MiB scoped default (64 MiB physical)
    return 12 * 1024 * 1024       # v5e / unknown: 16 MiB scoped default


def _base_col_tile(kind: str) -> int:
    """Output-column tile: 128 on v5e (128x128 MXU), 256 elsewhere (256x256)."""
    return 128 if "v5" in kind else 256


def _sublane_multiple(dtype) -> int:
    """Dtype-native sublane packing: 8 f32, 16 bf16, 32 int8/fp8."""
    return max(8, 32 // jnp.dtype(dtype).itemsize)


@functools.lru_cache(maxsize=None)
def _pool_band_matrix(l_in: int, l_out: int, col_tiles: int, tn: int,
                      w_p: int, banded: bool, dtype_name: str):
    """Per-column-tile pooling blocks, shape (col_tiles, w_p, tn).

    bands[j] maps the input window starting at (j*w_p if banded else 0) to
    output columns [j*tn, (j+1)*tn).  Columns beyond l_out are zero.
    """
    dense = np.zeros((l_in, col_tiles * tn), dtype=np.float32)
    for i in range(l_out):
        s = (i * l_in) // l_out
        e = -((-(i + 1) * l_in) // l_out)  # ceil((i+1)*l_in / l_out)
        dense[s:e, i] = 1.0 / float(e - s)
    bands = np.zeros((col_tiles, w_p, tn), dtype=np.float32)
    for j in range(col_tiles):
        row0 = j * w_p if banded else 0
        bands[j] = dense[row0:row0 + w_p, j * tn:(j + 1) * tn]
    return jnp.asarray(bands, dtype=jnp.dtype(dtype_name))


def _choose_tile_rows(m: int, w_x: int, tn: int, w_p: int,
                      x_bytes: int, p_bytes: int, budget: int, sub: int) -> int:
    """Row tile: fits the VMEM budget, keeps >= ~8 grid steps, sublane-multiple."""
    p_resident = 2 * w_p * tn * p_bytes                 # double-buffered P band
    per_row = 2 * (w_x + tn) * x_bytes + tn * 4         # x + out (x2) + f32 temp
    tm = (budget - p_resident) // max(per_row, 1)
    # Grid-depth floor: never collapse large M into one unpipelined block.
    depth_cap = max(sub, _round_up(pl.cdiv(m, 8), sub))
    tm = min(int(tm), _MAX_TILE_ROWS, depth_cap)
    tm = max(sub, (tm // sub) * sub)
    if m < tm:
        tm = m                                          # tiny inputs: one full block
    return tm


def _pool_kernel(x_ref, p_ref, o_ref):
    # One MXU matmul per (row tile, output-column tile), f32 accumulation.
    o_ref[...] = jnp.dot(
        x_ref[...], p_ref[...], preferred_element_type=jnp.float32
    ).astype(o_ref.dtype)


def adaptive_avg_pool1d(x: jax.Array, l_out: int, *, tile_rows=None) -> jax.Array:
    """x: (N, C, L_in) -> (N, C, l_out); matches torch.nn.AdaptiveAvgPool1d."""
    n, c, l_in = x.shape
    m = n * c
    kind = _device_kind()
    base_tn = _base_col_tile(kind)

    # Output-width policy: lane-dense padding only when cheap; exact width for
    # tiny l_out (avoids large write amplification + an extra slice pass).
    if l_out % _LANE == 0 or l_out < _LANE:
        l_out_pad = l_out
    else:
        l_out_pad = _round_up(l_out, _LANE)

    tn = min(base_tn, l_out_pad)
    col_tiles = pl.cdiv(l_out_pad, tn)

    # Banded x load: possible when every column tile's input window starts at a
    # multiple of a fixed, lane-aligned block width (always true for the
    # uniform case l_in % l_out == 0 with full column tiles).
    banded = (
        col_tiles > 1
        and l_out % tn == 0
        and l_in % col_tiles == 0
        and (l_in // col_tiles) % _LANE == 0
    )
    w_x = l_in // col_tiles if banded else l_in
    w_p = w_x

    # Never quantize the 1/window weights below bf16.
    p_dtype = jnp.bfloat16 if x.dtype == jnp.dtype(jnp.bfloat16) else jnp.float32
    p_bands = _pool_band_matrix(l_in, l_out, col_tiles, tn, w_p, banded,
                                jnp.dtype(p_dtype).name)

    x_bytes = x.dtype.itemsize
    p_bytes = jnp.dtype(p_dtype).itemsize
    sub = _sublane_multiple(x.dtype)
    budget = _vmem_budget_bytes(kind)
    tm = tile_rows if tile_rows is not None else _choose_tile_rows(
        m, w_x, tn, w_p, x_bytes, p_bytes, budget, sub)

    row_tiles = pl.cdiv(m, tm)

    if banded:
        x_index_map = lambda i, j: (i, j)      # disjoint band per column tile
    else:
        x_index_map = lambda i, j: (i, 0)      # resident across inner col axis

    cost = pl.CostEstimate(
        flops=2 * row_tiles * tm * col_tiles * w_x * tn,
        transcendentals=0,
        bytes_accessed=(m * l_in + m * l_out_pad) * x_bytes
        + row_tiles * col_tiles * w_p * tn * p_bytes,
    )

    out_flat = pl.pallas_call(
        _pool_kernel,
        out_shape=jax.ShapeDtypeStruct((m, l_out_pad), x.dtype),
        grid=(row_tiles, col_tiles),
        in_specs=[
            pl.BlockSpec((tm, w_x), x_index_map),
            pl.BlockSpec((None, w_p, tn), lambda i, j: (j, 0, 0)),
        ],
        out_specs=pl.BlockSpec((tm, tn), lambda i, j: (i, j)),
        compiler_params=pltpu.CompilerParams(
            dimension_semantics=("parallel", "arbitrary"),
        ),
        cost_estimate=cost,
    )(x.reshape(m, l_in), p_bands)

    if l_out_pad != l_out:
        out_flat = out_flat[:, :l_out]
    return out_flat.reshape(n, c, l_out)


class AdaptivePooling:
    """JAX/Pallas mirror of the PyTorch AdaptivePooling module (no params)."""

    def __init__(self, tgt_token_rate: int, seq_len: int):
        self.out_len = tgt_token_rate * seq_len

    def __call__(self, x: jax.Array) -> jax.Array:
        return adaptive_avg_pool1d(x, self.out_len)


def _reference_adaptive_avg_pool1d(x: np.ndarray, l_out: int) -> np.ndarray:
    n, c, l_in = x.shape
    out = np.zeros((n, c, l_out), dtype=np.float32)
    for i in range(l_out):
        start = (i * l_in) // l_out
        end = -((-(i + 1) * l_in) // l_out)
        out[..., i] = x[..., start:end].mean(axis=-1)
    return out


if __name__ == "__main__":
    key = jax.random.PRNGKey(0)
    k1, k2, k3 = jax.random.split(key, 3)

    # Case 1: shapes consistent with the module: batch=2, channels=4,
    # L_in=16, tgt_token_rate=1, seq_len=8 -> output length 8.
    tgt_token_rate, seq_len = 1, 8
    x = jax.random.normal(k1, (2, 4, 16), dtype=jnp.float32)
    module = AdaptivePooling(tgt_token_rate, seq_len)
    y = jax.block_until_ready(module(x))
    y_ref = _reference_adaptive_avg_pool1d(np.asarray(x), tgt_token_rate * seq_len)
    np.testing.assert_allclose(np.asarray(y), y_ref, rtol=1e-5, atol=1e-5)

    # Case 2: N*C (=20) not divisible by the row tile (=8), non-uniform pooling
    # windows (48 -> 10): exercises partial row blocks and floor/ceil windows.
    x2 = jax.random.normal(k2, (5, 4, 48), dtype=jnp.float32)
    y2 = jax.block_until_ready(adaptive_avg_pool1d(x2, 10, tile_rows=8))
    y2_ref = _reference_adaptive_avg_pool1d(np.asarray(x2), 10)
    np.testing.assert_allclose(np.asarray(y2), y2_ref, rtol=1e-5, atol=1e-5)

    # Case 3: uniform pooling 1024 -> 512 with multiple output-column tiles:
    # exercises the banded-P path (disjoint x bands, multi-tile 2-D grid).
    x3 = jax.random.normal(k3, (2, 8, 1024), dtype=jnp.float32)
    y3 = jax.block_until_ready(adaptive_avg_pool1d(x3, 512))
    y3_ref = _reference_adaptive_avg_pool1d(np.asarray(x3), 512)
    np.testing.assert_allclose(np.asarray(y3), y3_ref, rtol=1e-5, atol=1e-5)

    print("KERNEL_OK")
</pallas_src>

<mosaic_0001>
module attributes {stable_mosaic.version = 11 : i64} {
  func.func @_pool_kernel(%arg0: i32, %arg1: i32, %arg2: memref<8x16xf32, #tpu.memory_space<vmem>>, %arg3: memref<1x16x8xf32, #tpu.memory_space<vmem>>, %arg4: memref<8x8xf32, #tpu.memory_space<vmem>>) attributes {dimension_semantics = [#tpu.dimension_semantics<parallel>, #tpu.dimension_semantics<arbitrary>], iteration_bounds = array<i64: 1, 1>, scalar_prefetch = 0 : i64, scratch_operands = 0 : i64, tpu.core_type = #tpu.core_type<tc>, window_params = [{transform_indices = @transform_0, window_bounds = array<i64: 8, 16>}, {transform_indices = @transform_1, window_bounds = array<i64: 1, 16, 8>}, {transform_indices = @transform_2, window_bounds = array<i64: 8, 8>}]} {
    %c0 = arith.constant 0 : index
    %c0_0 = arith.constant 0 : index
    %0 = vector.load %arg2[%c0, %c0_0] : memref<8x16xf32, #tpu.memory_space<vmem>>, vector<8x16xf32>
    %c0_1 = arith.constant 0 : index
    %c0_2 = arith.constant 0 : index
    %c0_3 = arith.constant 0 : index
    %1 = vector.load %arg3[%c0_1, %c0_2, %c0_3] : memref<1x16x8xf32, #tpu.memory_space<vmem>>, vector<1x16x8xf32>
    %2 = vector.shape_cast %1 : vector<1x16x8xf32> to vector<16x8xf32>
    %cst = arith.constant dense<0.000000e+00> : vector<8x8xf32>
    %3 = tpu.matmul %0, %2, %cst {dimension_numbers = #tpu.dot_dimension_numbers<[1], [0], [0], [1], [0, 0, 1, 1], [], []>} : vector<8x16xf32>, vector<16x8xf32>, vector<8x8xf32> -> vector<8x8xf32>
    %c0_4 = arith.constant 0 : index
    %c0_5 = arith.constant 0 : index
    %4 = vector.load %arg4[%c0_4, %c0_5] : memref<8x8xf32, #tpu.memory_space<vmem>>, vector<8x8xf32>
    tpu.vector_store %arg4[%c0_4, %c0_5], %3 {strides = array<i32>} : memref<8x8xf32, #tpu.memory_space<vmem>>, vector<8x8xf32>,
    return
  }
  func.func @transform_0(%arg0: i32, %arg1: i32) -> (i32, i32) {
    %c0_i32 = arith.constant 0 : i32
    %c0_i32_0 = arith.constant 0 : i32
    return %arg0, %c0_i32 : i32, i32
  }
  func.func @transform_1(%arg0: i32, %arg1: i32) -> (i32, i32, i32) {
    %c0_i32 = arith.constant 0 : i32
    %c0_i32_0 = arith.constant 0 : i32
    %c0_i32_1 = arith.constant 0 : i32
    return %arg1, %c0_i32, %c0_i32_0 : i32, i32, i32
  }
  func.func @transform_2(%arg0: i32, %arg1: i32) -> (i32, i32) {
    %c0_i32 = arith.constant 0 : i32
    return %arg0, %arg1 : i32, i32
  }
}

</mosaic_0001>

<llo_original>
// kernel: tpu_custom_call.1
$region0: #{tpu_custom_call.1}
  #allocation0 [shape = 'u32[]', space=smem, size = 0x4, offset = 0x4, fixed_abs, tag = 'smem constant byte address 0x4 - core index']
  #allocation1 [shape = 'u32[72,128]{1,0:T(1,128)}', space=vmem, size = 0x9000, scoped, tag = 'internal scratch']
  %s0 = inlined_call_operand.vmem [shape: f32[8,16], index: 0, kind: input, shape index: {}]
  %s1 = inlined_call_operand.vmem [shape: f32[1,16,8], index: 1, kind: input, shape index: {}]
  %s2 = inlined_call_operand.hbm [shape: f32[8,8], index: 2, kind: output, shape index: {}]
  %s3 = sld [smem:[#allocation0]]
  $region18: #{tpu_custom_call.1} parent=0
    _
  %s5 = ssub.s32 1, %s3
  %s6 = scalar_select 0, %s5, %s3
  $region1: #{tpu_custom_call.1} parent=0
    #allocation2 [shape = 'u8[4096]{0}', space=vmem, size = 0x1000, scoped, tag = 'output window, operand 0, single buffered']
    #allocation3 [shape = 's32[1]{0}', space=sflag, size = 0x4, scoped, tag = 'scoped memory for tpu_custom_call.1']
    %7 = vsyncpa [#allocation3], 0
    // Predicated region
    $region2: #{tpu_custom_call.1} parent=1 // pred_check
      _
    $region3: #{tpu_custom_call.1} parent=1 // pred_check_branch
      %9 = sbr.rel (0) target = $region5
    $region4: #{tpu_custom_call.1} parent=1 // pred_region
      _
    $region5: #{tpu_custom_call.1} parent=1 // pred_fallthru
      _
    // Predicated region
    $region6: #{tpu_custom_call.1} parent=1 // pred_check
      _
    $region7: #{tpu_custom_call.1} parent=1 // pred_check_branch
      %11 = sbr.rel (0) target = $region9
    $region8: #{tpu_custom_call.1} parent=1 // pred_region
      _
    $region9: #{tpu_custom_call.1} parent=1 // pred_fallthru
      _
    %v12 = vld [vmem:[%s0] sm:$0xff]
    %v13 = vld [vmem:[%s1] sm:$0xff]
    %v14 = vld [vmem:[%s1 + $0x8] sm:$0xff]
    %vm15 = vcmask 130048
    %v17 = vsel %vm15, %v12, 0
    %19 = vmatpush.msra.mxu0 0.0
    %20 = vmatpush.msra.mxu0 0.0
    %21 = vmatpush.msra.mxu0 0.0
    %22 = vmatpush.msra.mxu0 0.0
    %23 = vmatpush.msra.mxu0 0.0
    %24 = vmatpush.msra.mxu0 0.0
    %25 = vmatpush.msra.mxu0 0.0
    %26 = vmatpush.msra.mxu0 0.0
    %27 = vmatpush.msra.mxu0 0.0
    %28 = vmatpush.msra.mxu0 0.0
    %29 = vmatpush.msra.mxu0 0.0
    %30 = vmatpush.msra.mxu0 0.0
    %31 = vmatpush.msra.mxu0 0.0
    %32 = vmatpush.msra.mxu0 0.0
    %33 = vmatpush.msra.mxu0 %v14
    %34 = vmatpush.msra.mxu0 %v13
    %35 = vmatmul.f32.gmra.mxu0 %v17
    %v36 = vpop.f32.mrf.mxu0
    %v37 = vadd.f32 0.0, %v36
    %38 = vdwg.mxu0
    %vm39 = vcmask 64512
    %40 = vst.msk [vmem:[#allocation2] sm:$0xff] %vm39, %v37
    // Predicated region
    $region10: #{tpu_custom_call.1} parent=1 // pred_check
      _
    $region11: #{tpu_custom_call.1} parent=1 // pred_check_branch
      %42 = sbr.rel (0) target = $region13
    $region12: #{tpu_custom_call.1} parent=1 // pred_region
      %44 = vsyncadd [#allocation3], 0
      %s46 = sshll.u32 [#allocation2], 4
      %s47 = int_to_ptr.vmem [resolvable:$true] %s46
      %s48 = sshll.u32 %s2, 4
      %s49 = int_to_ptr.hbm [resolvable:$true] %s48
      %51 = dma.vmem_to_hbm [thread:$0]  %s47, 128, %s49, [#allocation3]
    $region13: #{tpu_custom_call.1} parent=1 // pred_fallthru
      _
    // Predicated region
    $region14: #{tpu_custom_call.1} parent=1 // pred_check
      _
    $region15: #{tpu_custom_call.1} parent=1 // pred_check_branch
      %53 = sbr.rel (0) target = $region17
    $region16: #{tpu_custom_call.1} parent=1 // pred_region
      %55 = dma.done [#allocation3], 128
    $region17: #{tpu_custom_call.1} parent=1 // pred_fallthru
      _
    %56 = vsyncpa [#allocation3], 1

</llo_original>
